<compile_context>
chip_gen: v7x
topology: tpu7x:2x2x1
jax: 0.10.0
libtpu: 0.0.40
codegen_flags: <defaults>
</compile_context>

<pallas_src>
import functools

import jax
import jax.numpy as jnp
from jax.experimental import pallas as pl
from jax.experimental.pallas import tpu as pltpu


def _round_up(x, m):
    return (x + m - 1) // m * m


# ----------------------------------------------------------------------------
# Per-generation knobs.
# ----------------------------------------------------------------------------
def _tpu_config():
    vmem_cap = None
    try:
        info = pltpu.get_tpu_info()
        vmem_cap = getattr(info, "vmem_capacity_bytes", None)
    except Exception:
        vmem_cap = None
    if vmem_cap is not None and vmem_cap > (64 << 20):
        # 128 MiB parts (v5e / v6e): bigger tiles, more scoped VMEM.
        return {"vmem": 96 << 20, "tm": 512, "tn_cap": 512,
                "w_resident": 12 << 20, "in_fuse": 4 << 20, "in_tile": 4 << 20}
    # v7x-class (64 MiB VMEM per TensorCore) or unknown: conservative budget.
    return {"vmem": 40 << 20, "tm": 256, "tn_cap": 512,
            "w_resident": 9 << 20, "in_fuse": 2 << 20, "in_tile": 2 << 20}


_cfg = _tpu_config()
_LOSS_LANE = 512   # lane-dense width for elementwise loss reductions


def _cparams(dims):
    return pltpu.CompilerParams(dimension_semantics=dims,
                                vmem_limit_bytes=_cfg["vmem"])


def _pick_tile(p, cap, quantum=128):
    if p <= cap:
        return p
    for t in range(cap, quantum - 1, -quantum):
        if p % t == 0:
            return t
    return quantum


def _epilogue(y, act):
    if act == "relu":
        return jnp.maximum(y, 0.0)
    if act == "lrelu":
        return jnp.where(y >= 0.0, y, 0.2 * y)
    if act == "tanh":
        return jnp.tanh(y)
    return y


# ----------------------------------------------------------------------------
# Pallas kernel 1: weight-resident bf16 matmul with fused bias + activation.
# Grid is (N tiles, M tiles) so the (K, tn) weight block stays VMEM-resident
# across the whole inner M axis (DMA'd once, not once per M tile).
# ----------------------------------------------------------------------------
def _make_mm_resident_kernel(act):
    def kernel(a_ref, b_ref, bias_ref, o_ref):
        y = jnp.dot(a_ref[...], b_ref[...], preferred_element_type=jnp.float32)
        y = _epilogue(y + bias_ref[...], act)
        o_ref[...] = y.astype(o_ref.dtype)
    return kernel


def _make_mm_ksplit_kernel(act):
    def kernel(a_ref, b_ref, bias_ref, o_ref, acc_ref):
        @pl.when(pl.program_id(2) == 0)
        def _():
            acc_ref[...] = jnp.zeros_like(acc_ref)

        acc_ref[...] += jnp.dot(a_ref[...], b_ref[...],
                                preferred_element_type=jnp.float32)

        @pl.when(pl.program_id(2) == pl.num_programs(2) - 1)
        def _():
            y = _epilogue(acc_ref[...] + bias_ref[...], act)
            o_ref[...] = y.astype(o_ref.dtype)
    return kernel


_MM_RES = {a: _make_mm_resident_kernel(a) for a in ("none", "relu", "lrelu", "tanh")}
_MM_KSPLIT = {a: _make_mm_ksplit_kernel(a) for a in ("none", "relu", "lrelu", "tanh")}


def matmul_bias_act(a, w2d, bias, cout, act="none", out_dtype=jnp.bfloat16):
    """(M, K) bf16 patches @ (K, pn) bf16 weights; fused bias + activation."""
    M, K = a.shape
    pk, pn = w2d.shape          # pk == K (no K padding in the weight layout)
    tm = _cfg["tm"] if M > _cfg["tm"] else _round_up(M, 8)
    pm = _round_up(M, tm)
    tn = _pick_tile(pn, _cfg["tn_cap"])
    if pm != M:
        a = jnp.pad(a, ((0, pm - M), (0, 0)))

    if pk * pn * 2 <= _cfg["w_resident"]:
        out = pl.pallas_call(
            _MM_RES[act],
            out_shape=jax.ShapeDtypeStruct((pm, pn), out_dtype),
            grid_spec=pltpu.PrefetchScalarGridSpec(
                num_scalar_prefetch=0,
                grid=(pn // tn, pm // tm),            # N outer, M inner -> B resident
                in_specs=[pl.BlockSpec((tm, pk), lambda j, i: (i, 0)),
                          pl.BlockSpec((pk, tn), lambda j, i: (0, j)),
                          pl.BlockSpec((1, tn), lambda j, i: (0, j))],
                out_specs=pl.BlockSpec((tm, tn), lambda j, i: (i, j))),
            compiler_params=_cparams(("parallel", "parallel")),
        )(a, w2d, bias)
    else:
        # K-split fallback (not hit by this network's layer sizes).
        tk = _cfg["tn_cap"]
        pkk = _round_up(pk, tk)
        a2 = jnp.pad(a, ((0, 0), (0, pkk - pk))) if pkk != pk else a
        w2 = jnp.pad(w2d, ((0, pkk - pk), (0, 0))) if pkk != pk else w2d
        out = pl.pallas_call(
            _MM_KSPLIT[act],
            out_shape=jax.ShapeDtypeStruct((pm, pn), out_dtype),
            grid_spec=pltpu.PrefetchScalarGridSpec(
                num_scalar_prefetch=0,
                grid=(pm // tm, pn // tn, pkk // tk),
                in_specs=[pl.BlockSpec((tm, tk), lambda i, j, k: (i, k)),
                          pl.BlockSpec((tk, tn), lambda i, j, k: (k, j)),
                          pl.BlockSpec((1, tn), lambda i, j, k: (0, j))],
                out_specs=pl.BlockSpec((tm, tn), lambda i, j, k: (i, j)),
                scratch_shapes=[pltpu.VMEM((tm, tn), jnp.float32)]),
            compiler_params=_cparams(("parallel", "parallel", "arbitrary")),
        )(a2, w2, bias)
    return out[:M, :cout]


# ----------------------------------------------------------------------------
# Pallas kernel 2: direct stride-1 conv (no materialized im2col).
# The NHWC input is flattened per batch to (Hp*Wp, C); for each M tile the
# kernel DMAs one contiguous (tm + max_off, C) row window into VMEM and
# accumulates the kh*kw shifted tap matmuls in-kernel.  Output rows include
# (kw-1) junk columns per image row which are cropped in the wrapper.
# ----------------------------------------------------------------------------
@functools.lru_cache(maxsize=None)
def _make_direct_conv_kernel(kh, kw, wp, c, tm, act):
    offs = tuple(di * wp + dj for di in range(kh) for dj in range(kw))
    max_off = offs[-1]

    def kernel(x_hbm, w_ref, bias_ref, o_ref, xbuf, sem):
        b = pl.program_id(0)
        i = pl.program_id(1)
        copy = pltpu.make_async_copy(
            x_hbm.at[b, pl.ds(i * tm, tm + max_off)], xbuf, sem.at[0])
        copy.start()
        copy.wait()   # TODO(synk): double-buffer this DMA across M tiles.
        acc = None
        for t, off in enumerate(offs):
            lhs = xbuf[off:off + tm, :]
            wt = w_ref[t * c:(t + 1) * c, :]
            d = jnp.dot(lhs, wt, preferred_element_type=jnp.float32)
            acc = d if acc is None else acc + d
        y = _epilogue(acc + bias_ref[...], act)
        o_ref[...] = y.astype(o_ref.dtype)

    return kernel


def _conv2d_direct_s1(x, cp, act):
    B, Hp, Wp, C = x.shape
    kh, kw = cp["k"]
    K, pn = cp["w2d"].shape
    cout = cp["cout"]
    Ho, Wo = Hp - kh + 1, Wp - kw + 1
    M = Ho * Wp                                # includes (kw-1) junk cols / row
    tm = _cfg["tm"] if M > _cfg["tm"] else _round_up(M, 8)
    pm = _round_up(M, tm)
    max_off = (kh - 1) * Wp + (kw - 1)

    rows_needed = pm + max_off
    rows_have = Hp * Wp
    if rows_have < rows_needed:               # keep the tail DMA in-bounds
        extra_h = -(-(rows_needed - rows_have) // Wp)
        x = jnp.pad(x, ((0, 0), (0, extra_h), (0, 0), (0, 0)))
    x_flat = x.reshape(B, -1, C)

    out = pl.pallas_call(
        _make_direct_conv_kernel(kh, kw, Wp, C, tm, act),
        out_shape=jax.ShapeDtypeStruct((B, pm, pn), jnp.bfloat16),
        grid_spec=pltpu.PrefetchScalarGridSpec(
            num_scalar_prefetch=0,
            grid=(B, pm // tm),
            in_specs=[pl.BlockSpec(memory_space=pl.ANY),
                      pl.BlockSpec((K, pn), lambda b, i: (0, 0)),
                      pl.BlockSpec((1, pn), lambda b, i: (0, 0))],
            out_specs=pl.BlockSpec((None, tm, pn), lambda b, i: (b, i, 0)),
            scratch_shapes=[pltpu.VMEM((tm + max_off, C), jnp.bfloat16),
                            pltpu.SemaphoreType.DMA((1,))]),
        compiler_params=_cparams(("parallel", "arbitrary")),
    )(x_flat, cp["w2d"], cp["bias"])

    y = out[:, :M, :].reshape(B, Ho, Wp, pn)[:, :, :Wo, :cout]
    return y


# ----------------------------------------------------------------------------
# Pallas kernels 3/4: InstanceNorm2d(affine=False) + activation.
#   * fused single-pass kernel (centered variance) when the per-sample slab fits,
#   * byte-sized-tile two-pass path otherwise.
# ----------------------------------------------------------------------------
@functools.lru_cache(maxsize=None)
def _make_in_fused_kernel(hw, n_pad, eps, act):
    inv = 1.0 / float(hw)

    def kernel(x_ref, o_ref):
        x = x_ref[...].astype(jnp.float32)                  # (1, hw_pad, C)
        mean = jnp.sum(x, axis=1, keepdims=True) * inv
        xc = x - mean
        ssq = jnp.sum(xc * xc, axis=1, keepdims=True)
        if n_pad:                                           # padded zero rows became -mean
            ssq = ssq - float(n_pad) * mean * mean
        var = jnp.maximum(ssq * inv, 0.0)
        y = _epilogue(xc * jax.lax.rsqrt(var + eps), act)
        o_ref[...] = y.astype(o_ref.dtype)

    return kernel


def _in_stats_kernel(x_ref, s_ref, ss_ref):
    @pl.when(pl.program_id(1) == 0)
    def _():
        s_ref[...] = jnp.zeros_like(s_ref)
        ss_ref[...] = jnp.zeros_like(ss_ref)
    x = x_ref[...].astype(jnp.float32)
    s_ref[...] += jnp.sum(x, axis=1, keepdims=True)
    ss_ref[...] += jnp.sum(x * x, axis=1, keepdims=True)


@functools.lru_cache(maxsize=None)
def _make_in_apply_kernel(inv_hw, eps, act):
    def kernel(x_ref, s_ref, ss_ref, o_ref):
        x = x_ref[...].astype(jnp.float32)
        mean = s_ref[...] * inv_hw
        var = jnp.maximum(ss_ref[...] * inv_hw - mean * mean, 0.0)
        y = _epilogue((x - mean) * jax.lax.rsqrt(var + eps), act)
        o_ref[...] = y.astype(o_ref.dtype)
    return kernel


def instance_norm_act(x, act="none", eps=1e-5):
    B, H, W, C = x.shape
    HW = H * W
    hw8 = _round_up(HW, 8)
    xr = x.reshape(B, HW, C)

    if hw8 * C * 2 <= _cfg["in_fuse"]:
        n_pad = hw8 - HW
        if n_pad:
            xr = jnp.pad(xr, ((0, 0), (0, n_pad), (0, 0)))
        y = pl.pallas_call(
            _make_in_fused_kernel(HW, n_pad, float(eps), act),
            out_shape=jax.ShapeDtypeStruct((B, hw8, C), x.dtype),
            grid_spec=pltpu.PrefetchScalarGridSpec(
                num_scalar_prefetch=0, grid=(B,),
                in_specs=[pl.BlockSpec((1, hw8, C), lambda b: (b, 0, 0))],
                out_specs=pl.BlockSpec((1, hw8, C), lambda b: (b, 0, 0))),
            compiler_params=_cparams(("parallel",)),
        )(xr)
        if n_pad:
            y = y[:, :HW, :]
        return y.reshape(B, H, W, C)

    # Two-pass tiled path for big slabs; tile sized by bytes, not row count.
    t_hw = max(8, (_cfg["in_tile"] // (2 * C)) // 8 * 8)
    t_hw = min(t_hw, hw8)
    hw_pad = _round_up(HW, t_hw)
    n_t = hw_pad // t_hw
    if hw_pad != HW:
        xr = jnp.pad(xr, ((0, 0), (0, hw_pad - HW), (0, 0)))

    s, ss = pl.pallas_call(
        _in_stats_kernel,
        out_shape=(jax.ShapeDtypeStruct((B, 1, C), jnp.float32),
                   jax.ShapeDtypeStruct((B, 1, C), jnp.float32)),
        grid_spec=pltpu.PrefetchScalarGridSpec(
            num_scalar_prefetch=0, grid=(B, n_t),
            in_specs=[pl.BlockSpec((1, t_hw, C), lambda b, t: (b, t, 0))],
            out_specs=[pl.BlockSpec((1, 1, C), lambda b, t: (b, 0, 0)),
                       pl.BlockSpec((1, 1, C), lambda b, t: (b, 0, 0))]),
        compiler_params=_cparams(("parallel", "arbitrary")),
    )(xr)

    y = pl.pallas_call(
        _make_in_apply_kernel(1.0 / float(HW), float(eps), act),
        out_shape=jax.ShapeDtypeStruct((B, hw_pad, C), x.dtype),
        grid_spec=pltpu.PrefetchScalarGridSpec(
            num_scalar_prefetch=0, grid=(B, n_t),
            in_specs=[pl.BlockSpec((1, t_hw, C), lambda b, t: (b, t, 0)),
                      pl.BlockSpec((1, 1, C), lambda b, t: (b, 0, 0)),
                      pl.BlockSpec((1, 1, C), lambda b, t: (b, 0, 0))],
            out_specs=pl.BlockSpec((1, t_hw, C), lambda b, t: (b, t, 0))),
        compiler_params=_cparams(("parallel", "parallel")),
    )(xr, s, ss)
    if hw_pad != HW:
        y = y[:, :HW, :]
    return y.reshape(B, H, W, C)


# ----------------------------------------------------------------------------
# Pallas kernel 5: tiled, lane-dense full reductions for the losses.
# Kernels accumulate raw sums; the 1/N scale is applied once in the wrapper.
# ----------------------------------------------------------------------------
def _l1_sum_kernel(a_ref, b_ref, o_ref):
    @pl.when(pl.program_id(0) == 0)
    def _():
        o_ref[...] = jnp.zeros_like(o_ref)
    d = jnp.abs(a_ref[...].astype(jnp.float32) - b_ref[...].astype(jnp.float32))
    s = jnp.sum(d, axis=1, keepdims=True)
    o_ref[...] += jnp.sum(s, axis=0, keepdims=True)


@functools.lru_cache(maxsize=None)
def _make_sq_sum_kernel(const):
    def kernel(a_ref, o_ref):
        @pl.when(pl.program_id(0) == 0)
        def _():
            o_ref[...] = jnp.zeros_like(o_ref)
        d = a_ref[...].astype(jnp.float32) - const
        s = jnp.sum(d * d, axis=1, keepdims=True)
        o_ref[...] += jnp.sum(s, axis=0, keepdims=True)
    return kernel


def _lane_dense(x, pad_value):
    flat = x.reshape(-1)
    n = flat.shape[0]
    rows = -(-n // _LOSS_LANE)
    tr = 256 if rows > 256 else _round_up(rows, 8)
    rows_pad = _round_up(rows, tr)
    pad = rows_pad * _LOSS_LANE - n
    if pad:
        flat = jnp.pad(flat, (0, pad), constant_values=pad_value)
    return flat.reshape(rows_pad, _LOSS_LANE), tr, n


def l1_loss(a, b):
    ar, tr, n = _lane_dense(a, 0.0)
    br, _, _ = _lane_dense(b, 0.0)            # zero-padded: |0 - 0| adds nothing
    out = pl.pallas_call(
        _l1_sum_kernel,
        out_shape=jax.ShapeDtypeStruct((1, 1), jnp.float32),
        grid_spec=pltpu.PrefetchScalarGridSpec(
            num_scalar_prefetch=0,
            grid=(ar.shape[0] // tr,),
            in_specs=[pl.BlockSpec((tr, _LOSS_LANE), lambda r: (r, 0)),
                      pl.BlockSpec((tr, _LOSS_LANE), lambda r: (r, 0))],
            out_specs=pl.BlockSpec((1, 1), lambda r: (0, 0))),
        compiler_params=_cparams(("arbitrary",)),
    )(ar, br)
    return out[0, 0] * (1.0 / float(n))


def mse_const_loss(a, const):
    ar, tr, n = _lane_dense(a, float(const))  # pad with target: (t - t)^2 adds nothing
    out = pl.pallas_call(
        _make_sq_sum_kernel(float(const)),
        out_shape=jax.ShapeDtypeStruct((1, 1), jnp.float32),
        grid_spec=pltpu.PrefetchScalarGridSpec(
            num_scalar_prefetch=0,
            grid=(ar.shape[0] // tr,),
            in_specs=[pl.BlockSpec((tr, _LOSS_LANE), lambda r: (r, 0))],
            out_specs=pl.BlockSpec((1, 1), lambda r: (0, 0))),
        compiler_params=_cparams(("arbitrary",)),
    )(ar)
    return out[0, 0] * (1.0 / float(n))


# ----------------------------------------------------------------------------
# Convolution wrappers.
# ----------------------------------------------------------------------------
def _im2col(x, kh, kw, stride):
    B, H, W, C = x.shape
    Ho = (H - kh) // stride + 1
    Wo = (W - kw) // stride + 1
    cols = []
    for i in range(kh):
        for j in range(kw):
            cols.append(x[:, i:i + stride * (Ho - 1) + 1:stride,
                            j:j + stride * (Wo - 1) + 1:stride, :])
    patches = jnp.stack(cols, axis=3)  # (B, Ho, Wo, kh*kw, C)
    return patches.reshape(B * Ho * Wo, kh * kw * C), (B, Ho, Wo)


def _conv2d_core(x, cp, stride, act):
    B, Hp, Wp, C = x.shape
    kh, kw = cp["k"]
    K, pn = cp["w2d"].shape
    if (stride == 1 and C % 8 == 0 and C >= 64
            and K * pn * 2 <= _cfg["w_resident"]):
        return _conv2d_direct_s1(x, cp, act)
    # TODO(synk): strided convs still go through im2col; phase-decompose them.
    patches, (B, Ho, Wo) = _im2col(x, kh, kw, stride)
    y = matmul_bias_act(patches, cp["w2d"], cp["bias"], cp["cout"], act)
    return y.reshape(B, Ho, Wo, cp["cout"])


def conv2d(x, cp, stride=1, padding=0, pad_mode="constant", act="none"):
    x = x.astype(jnp.bfloat16)
    if padding > 0:
        x = jnp.pad(x, ((0, 0), (padding, padding), (padding, padding), (0, 0)),
                    mode=pad_mode)
    return _conv2d_core(x, cp, stride, act)


def conv_transpose2d(x, cp, stride=2, padding=1, output_padding=1, act="none"):
    # ConvTranspose2d == stride-1 conv over a zero-dilated, zero-padded input with the
    # spatially flipped kernel (the flip is absorbed into the random init).
    B, H, W, C = x.shape
    kh, kw = cp["k"]
    x = x.astype(jnp.bfloat16)
    xd = jnp.zeros((B, (H - 1) * stride + 1, (W - 1) * stride + 1, C), x.dtype)
    xd = xd.at[:, ::stride, ::stride, :].set(x)
    lo = kh - 1 - padding
    hi = kh - 1 - padding + output_padding
    xd = jnp.pad(xd, ((0, 0), (lo, hi), (lo, hi), (0, 0)))
    return _conv2d_core(xd, cp, 1, act)


def avg_pool_3s2p1(x):
    # nn.AvgPool2d(3, stride=2, padding=1, count_include_pad=False)
    pad = [(0, 0), (1, 1), (1, 1), (0, 0)]
    zero = jnp.array(0, x.dtype)
    s = jax.lax.reduce_window(x, zero, jax.lax.add, (1, 3, 3, 1), (1, 2, 2, 1), pad)
    ones = jnp.ones((1,) + x.shape[1:3] + (1,), x.dtype)
    cnt = jax.lax.reduce_window(ones, zero, jax.lax.add, (1, 3, 3, 1), (1, 2, 2, 1), pad)
    return s / cnt


def max_pool_2x2(x):
    ninf = jnp.array(-jnp.inf, x.dtype)
    return jax.lax.reduce_window(x, ninf, jax.lax.max,
                                 (1, 2, 2, 1), (1, 2, 2, 1), "VALID")


# ----------------------------------------------------------------------------
# Deterministic parameter initialization (weights_init: conv ~ N(0, 0.02)).
# Weights are pre-reshaped to (K, Cout_pad128) bf16 once; no K padding.
# ----------------------------------------------------------------------------
class ParamGen:
    def __init__(self, seed):
        self.key = jax.random.PRNGKey(seed)

    def conv(self, kh, kw, cin, cout, std=0.02):
        self.key, k = jax.random.split(self.key)
        w = jax.random.normal(k, (kh, kw, cin, cout), jnp.float32) * std
        K = kh * kw * cin
        pn = _round_up(cout, 128)
        w2d = jnp.zeros((K, pn), jnp.bfloat16)
        w2d = w2d.at[:, :cout].set(w.reshape(K, cout).astype(jnp.bfloat16))
        bias = jnp.zeros((1, pn), jnp.float32)
        return {"w2d": w2d, "bias": bias, "k": (kh, kw), "cout": cout}


# ----------------------------------------------------------------------------
# GlobalGenerator (ngf=64, n_downsampling=3, n_blocks=9, InstanceNorm, reflect pad)
# ----------------------------------------------------------------------------
def init_global_generator(pg, input_nc, output_nc, ngf=64, n_down=3, n_blocks=9):
    p = {"head": pg.conv(7, 7, input_nc, ngf), "down": [], "res": [], "up": []}
    for i in range(n_down):
        mult = 2 ** i
        p["down"].append(pg.conv(3, 3, ngf * mult, ngf * mult * 2))
    mult = 2 ** n_down
    for _ in range(n_blocks):
        p["res"].append((pg.conv(3, 3, ngf * mult, ngf * mult),
                         pg.conv(3, 3, ngf * mult, ngf * mult)))
    for i in range(n_down):
        mult = 2 ** (n_down - i)
        p["up"].append(pg.conv(3, 3, ngf * mult, ngf * mult // 2))
    p["tail"] = pg.conv(7, 7, ngf, output_nc)
    return p


def global_generator(p, x):
    h = jnp.pad(x.astype(jnp.bfloat16), ((0, 0), (3, 3), (3, 3), (0, 0)), mode="reflect")
    h = conv2d(h, p["head"])
    h = instance_norm_act(h, "relu")
    for cp in p["down"]:
        h = conv2d(h, cp, stride=2, padding=1)
        h = instance_norm_act(h, "relu")
    for c1, c2 in p["res"]:
        r = jnp.pad(h, ((0, 0), (1, 1), (1, 1), (0, 0)), mode="reflect")
        r = conv2d(r, c1)
        r = instance_norm_act(r, "relu")
        r = jnp.pad(r, ((0, 0), (1, 1), (1, 1), (0, 0)), mode="reflect")
        r = conv2d(r, c2)
        r = instance_norm_act(r, "none")
        h = h + r
    for cp in p["up"]:
        h = conv_transpose2d(h, cp, stride=2, padding=1, output_padding=1)
        h = instance_norm_act(h, "relu")
    h = jnp.pad(h, ((0, 0), (3, 3), (3, 3), (0, 0)), mode="reflect")
    return conv2d(h, p["tail"], act="tanh")   # tanh fused into the conv epilogue


# ----------------------------------------------------------------------------
# MultiscaleDiscriminator (ndf=64, n_layers=3, num_D=2, InstanceNorm,
# intermediate features returned for the GAN feature-matching loss).
# ----------------------------------------------------------------------------
def init_nlayer_d(pg, input_nc, ndf=64, n_layers=3):
    layers = [dict(p=pg.conv(4, 4, input_nc, ndf), stride=2, norm=False, act="lrelu")]
    nf = ndf
    for _ in range(1, n_layers):
        nf_prev, nf = nf, min(nf * 2, 512)
        layers.append(dict(p=pg.conv(4, 4, nf_prev, nf), stride=2, norm=True, act="lrelu"))
    nf_prev, nf = nf, min(nf * 2, 512)
    layers.append(dict(p=pg.conv(4, 4, nf_prev, nf), stride=1, norm=True, act="lrelu"))
    layers.append(dict(p=pg.conv(4, 4, nf, 1), stride=1, norm=False, act="none"))
    return layers


def nlayer_d_forward(layers, x):
    feats, h = [], x
    for lyr in layers:
        if lyr["norm"]:
            h = conv2d(h, lyr["p"], stride=lyr["stride"], padding=2)
            h = instance_norm_act(h, lyr["act"])
        else:
            h = conv2d(h, lyr["p"], stride=lyr["stride"], padding=2, act=lyr["act"])
        feats.append(h)
    return feats  # n_layers + 2 feature maps (getIntermFeat semantics)


def init_multiscale_d(pg, input_nc, ndf=64, n_layers=3, num_D=2):
    return [init_nlayer_d(pg, input_nc, ndf, n_layers) for _ in range(num_D)]


def multiscale_d_forward(params, x, num_D=2):
    result, xd = [], x
    for i in range(num_D):
        result.append(nlayer_d_forward(params[i], xd))
        if i != num_D - 1:
            xd = avg_pool_3s2p1(xd)
    return result


# ----------------------------------------------------------------------------
# VGG19 feature slices for the VGG perceptual loss.
# TODO(synk): torchvision-pretrained VGG19 weights cannot be loaded here;
#             weights are initialized deterministically instead.
# ----------------------------------------------------------------------------
_VGG_SLICES = [
    [("conv", 3, 64)],
    [("conv", 64, 64), ("pool",), ("conv", 64, 128)],
    [("conv", 128, 128), ("pool",), ("conv", 128, 256)],
    [("conv", 256, 256), ("conv", 256, 256), ("conv", 256, 256), ("pool",), ("conv", 256, 512)],
    [("conv", 512, 512), ("conv", 512, 512), ("conv", 512, 512), ("pool",), ("conv", 512, 512)],
]


def init_vgg19(pg):
    params = []
    for sl in _VGG_SLICES:
        params.append([pg.conv(3, 3, op[1], op[2], std=0.05) if op[0] == "conv" else None
                       for op in sl])
    return params


def vgg19_features(params, x):
    feats, h = [], x.astype(jnp.bfloat16)
    for sl, ps in zip(_VGG_SLICES, params):
        for op, p in zip(sl, ps):
            if op[0] == "conv":
                h = conv2d(h, p, padding=1, act="relu")   # relu fused in the epilogue
            else:
                h = max_pool_2x2(h)
        feats.append(h)
    return feats


def gan_loss(preds, target_is_real):
    # GANLoss(use_lsgan=True): sum over scales of MSE(pred[-1], target)
    t = 1.0 if target_is_real else 0.0
    loss = 0.0
    for pred in preds:
        loss = loss + mse_const_loss(pred[-1], t)
    return loss


# ----------------------------------------------------------------------------
# Pix2PixHDModel (forward semantics of the training-mode forward()).
# ----------------------------------------------------------------------------
class Pix2PixHDPallas:
    def __init__(self, label_nc, output_nc, seed=0):
        pg = ParamGen(seed)
        self.label_nc = label_nc
        self.output_nc = output_nc
        self.n_layers_D = 3
        self.num_D = 2
        self.lambda_feat = 10.0
        netG_input_nc = label_nc              # no_instance=True, use_features=False
        netD_input_nc = output_nc + label_nc
        self.G = init_global_generator(pg, netG_input_nc, output_nc)
        self.D = init_multiscale_d(pg, netD_input_nc, 64, self.n_layers_D, self.num_D)
        self.vgg = init_vgg19(pg)

    def forward(self, input_label, real_image, feat_map=None, infer=False):
        del feat_map  # use_features=False
        B = input_label.shape[0]
        fake_image = global_generator(self.G, input_label)

        # pool_size == 0 -> ImagePool.query is identity and detach() has no forward
        # effect, so pred_fake_pool == pred_fake: run the discriminator once on the
        # fake path and once on the real path, batched together (2B batch).
        label_bf = input_label.astype(jnp.bfloat16)
        d_in = jnp.concatenate(
            [jnp.concatenate([label_bf, fake_image.astype(jnp.bfloat16)], axis=-1),
             jnp.concatenate([label_bf, real_image.astype(jnp.bfloat16)], axis=-1)],
            axis=0)
        pred_both = multiscale_d_forward(self.D, d_in, self.num_D)
        pred_fake = [[f[:B] for f in scale] for scale in pred_both]
        pred_real = [[f[B:] for f in scale] for scale in pred_both]

        loss_D_fake = gan_loss(pred_fake, False)
        loss_D_real = gan_loss(pred_real, True)
        loss_G_GAN = gan_loss(pred_fake, True)

        feat_weights = 4.0 / (self.n_layers_D + 1)
        D_weights = 1.0 / self.num_D
        loss_G_GAN_Feat = 0.0
        for i in range(self.num_D):
            for j in range(len(pred_fake[i]) - 1):
                loss_G_GAN_Feat = loss_G_GAN_Feat + D_weights * feat_weights * \
                    l1_loss(pred_fake[i][j], pred_real[i][j]) * self.lambda_feat

        # VGG perceptual loss: fake and real batched through one VGG pass.
        vgg_in = jnp.concatenate([fake_image.astype(jnp.bfloat16),
                                  real_image.astype(jnp.bfloat16)], axis=0)
        feats = vgg19_features(self.vgg, vgg_in)
        vgg_w = [1.0 / 32, 1.0 / 16, 1.0 / 8, 1.0 / 4, 1.0]
        loss_G_VGG = 0.0
        for w, f in zip(vgg_w, feats):
            loss_G_VGG = loss_G_VGG + w * l1_loss(f[:B], f[B:])
        loss_G_VGG = loss_G_VGG * self.lambda_feat

        losses = [loss_G_GAN, loss_G_GAN_Feat, loss_G_VGG, loss_D_real, loss_D_fake]
        return [losses, fake_image if infer else None]


if __name__ == "__main__":
    B, H, W = 2, 16, 16
    label_nc, output_nc = 4, 3

    key = jax.random.PRNGKey(0)
    k1, k2 = jax.random.split(key)
    # PyTorch inputs are NCHW; transpose to the kernel's NHWC layout at the boundary.
    input_label_nchw = jax.random.normal(k1, (B, label_nc, H, W), jnp.float32)
    real_image_nchw = jax.random.normal(k2, (B, output_nc, H, W), jnp.float32)
    input_label = jnp.transpose(input_label_nchw, (0, 2, 3, 1))
    real_image = jnp.transpose(real_image_nchw, (0, 2, 3, 1))

    model = Pix2PixHDPallas(label_nc, output_nc, seed=0)
    losses, fake_image = model.forward(input_label, real_image, feat_map=None, infer=True)

    losses = [jnp.asarray(l) for l in losses]
    jax.block_until_ready(losses)
    jax.block_until_ready(fake_image)
    print("KERNEL_OK")
</pallas_src>

<mosaic_0001>
module attributes {stable_mosaic.version = 11 : i64} {
  func.func @kernel(%arg0: i32, %arg1: i32, %arg2: memref<256x196xbf16, #tpu.memory_space<vmem>>, %arg3: memref<196x128xbf16, #tpu.memory_space<vmem>>, %arg4: memref<1x128xf32, #tpu.memory_space<vmem>>, %arg5: memref<256x128xbf16, #tpu.memory_space<vmem>>) attributes {dimension_semantics = [#tpu.dimension_semantics<parallel>, #tpu.dimension_semantics<parallel>], iteration_bounds = array<i64: 1, 2>, scalar_prefetch = 0 : i64, scratch_operands = 0 : i64, tpu.core_type = #tpu.core_type<tc>, window_params = [{transform_indices = @transform_0, window_bounds = array<i64: 256, 196>}, {transform_indices = @transform_1, window_bounds = array<i64: 196, 128>}, {transform_indices = @transform_2, window_bounds = array<i64: 1, 128>}, {transform_indices = @transform_3, window_bounds = array<i64: 256, 128>}]} {
    %c0 = arith.constant 0 : index
    %c0_0 = arith.constant 0 : index
    %0 = vector.load %arg2[%c0, %c0_0] : memref<256x196xbf16, #tpu.memory_space<vmem>>, vector<256x196xbf16>
    %c0_1 = arith.constant 0 : index
    %c0_2 = arith.constant 0 : index
    %1 = vector.load %arg3[%c0_1, %c0_2] : memref<196x128xbf16, #tpu.memory_space<vmem>>, vector<196x128xbf16>
    %cst = arith.constant dense<0.000000e+00> : vector<256x128xf32>
    %2 = tpu.matmul %0, %1, %cst {dimension_numbers = #tpu.dot_dimension_numbers<[1], [0], [0], [1], [0, 0, 1, 1], [], []>} : vector<256x196xbf16>, vector<196x128xbf16>, vector<256x128xf32> -> vector<256x128xf32>
    %c0_3 = arith.constant 0 : index
    %c0_4 = arith.constant 0 : index
    %3 = vector.load %arg4[%c0_3, %c0_4] : memref<1x128xf32, #tpu.memory_space<vmem>>, vector<1x128xf32>
    %4 = vector.broadcast %3 : vector<1x128xf32> to vector<256x128xf32>
    %5 = arith.addf %2, %4 : vector<256x128xf32>
    %6 = arith.truncf %5 : vector<256x128xf32> to vector<256x128xbf16>
    %c0_5 = arith.constant 0 : index
    %c0_6 = arith.constant 0 : index
    %7 = vector.load %arg5[%c0_5, %c0_6] : memref<256x128xbf16, #tpu.memory_space<vmem>>, vector<256x128xbf16>
    tpu.vector_store %arg5[%c0_5, %c0_6], %6 {strides = array<i32>} : memref<256x128xbf16, #tpu.memory_space<vmem>>, vector<256x128xbf16>,
    return
  }
  func.func @transform_0(%arg0: i32, %arg1: i32) -> (i32, i32) {
    %c0_i32 = arith.constant 0 : i32
    %c0_i32_0 = arith.constant 0 : i32
    return %arg1, %c0_i32 : i32, i32
  }
  func.func @transform_1(%arg0: i32, %arg1: i32) -> (i32, i32) {
    %c0_i32 = arith.constant 0 : i32
    %c0_i32_0 = arith.constant 0 : i32
    return %c0_i32, %arg0 : i32, i32
  }
  func.func @transform_2(%arg0: i32, %arg1: i32) -> (i32, i32) {
    %c0_i32 = arith.constant 0 : i32
    %c0_i32_0 = arith.constant 0 : i32
    return %c0_i32, %arg0 : i32, i32
  }
  func.func @transform_3(%arg0: i32, %arg1: i32) -> (i32, i32) {
    %c0_i32 = arith.constant 0 : i32
    return %arg1, %arg0 : i32, i32
  }
}

</mosaic_0001>

<llo_original>
// kernel: tpu_custom_call.1
$region0: #{tpu_custom_call.1}
  #allocation0 [shape = 'u32[]', space=smem, size = 0x4, offset = 0x4, fixed_abs, tag = 'smem constant byte address 0x4 - core index']
  #allocation1 [shape = 'u32[144,128]{1,0:T(1,128)}', space=vmem, size = 0x12000, scoped, tag = 'internal scratch']
  %s0 = inlined_call_operand.vmem [shape: bf16[512,196], index: 0, kind: input, shape index: {}]
  %s1 = inlined_call_operand.vmem [shape: bf16[196,128], index: 1, kind: input, shape index: {}]
  %s2 = inlined_call_operand.vmem [shape: f32[1,128], index: 2, kind: input, shape index: {}]
  %s3 = inlined_call_operand.hbm [shape: bf16[512,128], index: 3, kind: output, shape index: {}]
  %s4 = sld [smem:[#allocation0]]
  $region45: #{tpu_custom_call.1} parent=0
    _
  %s6 = ssub.s32 1, %s4
  %s7 = scalar_select 0, %s6, %s4
  $region1: #{tpu_custom_call.1} parent=0
    #allocation2 [shape = 'u8[131072]{0}', space=vmem, size = 0x20000, scoped, tag = 'output window, operand 0']
    #allocation3 [shape = 's32[2]{0}', space=sflag, size = 0x8, scoped, tag = 'scoped memory for tpu_custom_call.1']
    %8 = vsyncpa [#allocation3], 0
    %s9 = scalar_lea.sflag [#allocation3], 1
    %10 = vsyncpa %s9, 0
    loop: start=0, step=1, limit=4
    $region2: #{tpu_custom_call.1} parent=1 // loop_pre_header
      _
    $region3: #{tpu_custom_call.1} parent=1 // loop_header
      %s12 = sphi 0, %s16
      %p13 = scmp.ge.s32.totalorder %s12, 4
      %s19 = sphi 0, %s31
      %s20 = sphi 0, %s27
      %s21 = sphi 0, %s19
      %s22 = sphi 0, %s20
      %s23 = sphi 0, %s21
      %s24 = sphi 0, %s22
      %s34 = sphi 0, %s36
      %s37 = sphi 0, %s34
      %s38 = sphi 0, %s37
      %s54 = sphi 0, %s38
      %s60 = sphi 0, %s62
      %s63 = sphi 0, %s60
      %s64 = sphi 0, %s63
      %s80 = sphi 0, %s64
      %s86 = sphi 0, %s88
      %s89 = sphi 0, %s86
      %s90 = sphi 0, %s89
      %s106 = sphi 0, %s90
      %s114 = sphi 0, %s116
      %s117 = sphi 0, %s114
      %s118 = sphi 0, %s117
      %s134 = sphi 0, %s118
    $region4: #{tpu_custom_call.1} parent=1 // loop_header_branch
      %15 = sbr.rel (%p13) target = $region8
    $region5: #{tpu_custom_call.1} parent=1 // loop_body
      %s17 = ssub.s32 %s12, 1
      %s18 = ssub.s32 %s12, 2
      %s25 = sadd.s32 1, %s20
      %p26 = scmp.ge.s32.totalorder %s25, 2
      %s27 = scalar_select %p26, 0, %s25
      %s28 = sadd.s32 1, %s19
      %s29 = scalar_select %p26, %s28, %s19
      %p30 = scmp.ge.s32.totalorder %s29, 1
      %s31 = scalar_select %p30, 0, %s29
      %s32 = ssub.s32 %s20, %s27
      %p33 = scmp.eq.s32.totalorder %s32, 0
      %s35 = sadd.s32 %s34, 1
      %s36 = scalar_select %p33, %s34, %s35
      %p39 = pneg %p33
      %p40 = scmp.eq.s32.totalorder %s12, 1
      %p41 = por %p39, %p40
      %p42 = scmp.ne.s32.totalorder %s34, %s37
      %p43 = scmp.eq.s32.totalorder %s12, 0
      %p44 = por %p42, %p43
      %p45 = scmp.ne.s32.totalorder %s34, %s37
      %p46 = scmp.eq.s32.totalorder %s17, 1
      %p47 = por %p45, %p46
      %p48 = scmp.ne.s32.totalorder %s37, %s38
      %p49 = scmp.eq.s32.totalorder %s17, 0
      %p50 = por %p48, %p49
      %p51 = scmp.ne.s32.totalorder %s37, %s38
      %p52 = scmp.eq.s32.totalorder %s18, 1
      %p53 = por %p51, %p52
      %p55 = scmp.ne.s32.totalorder %s38, %s54
      %p56 = scmp.eq.s32.totalorder %s18, 0
      %p57 = por %p55, %p56
      %s58 = ssub.s32 %s19, %s31
      %p59 = scmp.eq.s32.totalorder %s58, 0
      %s61 = sadd.s32 %s60, 1
      %s62 = scalar_select %p59, %s60, %s61
      %p65 = pneg %p59
      %p66 = scmp.eq.s32.totalorder %s12, 1
      %p67 = por %p65, %p66
      %p68 = scmp.ne.s32.totalorder %s60, %s63
      %p69 = scmp.eq.s32.totalorder %s12, 0
      %p70 = por %p68, %p69
      %p71 = scmp.ne.s32.totalorder %s60, %s63
      %p72 = scmp.eq.s32.totalorder %s17, 1
      %p73 = por %p71, %p72
      %p74 = scmp.ne.s32.totalorder %s63, %s64
      %p75 = scmp.eq.s32.totalorder %s17, 0
      %p76 = por %p74, %p75
      %p77 = scmp.ne.s32.totalorder %s63, %s64
      %p78 = scmp.eq.s32.totalorder %s18, 1
      %p79 = por %p77, %p78
      %p81 = scmp.ne.s32.totalorder %s64, %s80
      %p82 = scmp.eq.s32.totalorder %s18, 0
      %p83 = por %p81, %p82
      %s84 = ssub.s32 %s19, %s31
      %p85 = scmp.eq.s32.totalorder %s84, 0
      %s87 = sadd.s32 %s86, 1
      %s88 = scalar_select %p85, %s86, %s87
      %p91 = pneg %p85
      %p92 = scmp.eq.s32.totalorder %s12, 1
      %p93 = por %p91, %p92
      %p94 = scmp.ne.s32.totalorder %s86, %s89
      %p95 = scmp.eq.s32.totalorder %s12, 0
      %p96 = por %p94, %p95
      %p97 = scmp.ne.s32.totalorder %s86, %s89
      %p98 = scmp.eq.s32.totalorder %s17, 1
      %p99 = por %p97, %p98
      %p100 = scmp.ne.s32.totalorder %s89, %s90
      %p101 = scmp.eq.s32.totalorder %s17, 0
      %p102 = por %p100, %p101
      %p103 = scmp.ne.s32.totalorder %s89, %s90
      %p104 = scmp.eq.s32.totalorder %s18, 1
      %p105 = por %p103, %p104
      %p107 = scmp.ne.s32.totalorder %s90, %s106
      %p108 = scmp.eq.s32.totalorder %s18, 0
      %p109 = por %p107, %p108
      %s110 = ssub.s32 %s20, %s27
      %s111 = ssub.s32 %s19, %s31
      %s112 = sor.u32 %s110, %s111
      %p113 = scmp.eq.s32.totalorder %s112, 0
      %s115 = sadd.s32 %s114, 1
      %s116 = scalar_select %p113, %s114, %s115
      %p119 = pneg %p113
      %p120 = scmp.eq.s32.totalorder %s12, 1
      %p121 = por %p119, %p120
      %p122 = scmp.ne.s32.totalorder %s114, %s117
      %p123 = scmp.eq.s32.totalorder %s12, 0
      %p124 = por %p122, %p123
      %p125 = scmp.ne.s32.totalorder %s114, %s117
      %p126 = scmp.eq.s32.totalorder %s17, 1
      %p127 = por %p125, %p126
      %p128 = scmp.ne.s32.totalorder %s117, %s118
      %p129 = scmp.eq.s32.totalorder %s17, 0
      %p130 = por %p128, %p129
      %p131 = scmp.ne.s32.totalorder %s117, %s118
      %p132 = scmp.eq.s32.totalorder %s18, 1
      %p133 = por %p131, %p132
      %p135 = scmp.ne.s32.totalorder %s118, %s134
      %p136 = scmp.eq.s32.totalorder %s18, 0
      %p137 = por %p135, %p136
      %p138 = scmp.le.s32.totalorder 1, %s12
      %p139 = scmp.lt.s32.totalorder %s12, 3
      %p140 = pnand %p138, %p139
      %p141 = pneg %p140
      // Predicated region
      $region9: #{tpu_custom_call.1} parent=5 // pred_check
        _
      $region10: #{tpu_custom_call.1} parent=5 // pred_check_branch
        %143 = sbr.rel (%p140) target = $region12
      $region11: #{tpu_custom_call.1} parent=5 // pred_region
        %s144 = ssub.s32 %s12, 1
        // Predicated region
        $region13: #{tpu_custom_call.1} parent=11 // pred_check
          %p145 = pneg %p76
        $region14: #{tpu_custom_call.1} parent=11 // pred_check_branch
          %147 = sbr.rel (%p145) target = $region16
        $region15: #{tpu_custom_call.1} parent=11 // pred_region
          %p148 = scmp.lt.s32.totalorder %s21, 0
          %s149 = scalar_select %p148, %s21, 0
          %s150 = smul.addr %s149, 4
          %s151 = scalar_lea.vmem %s1, %s150
        $region16: #{tpu_custom_call.1} parent=11 // pred_fallthru
          _
        // Predicated region
        $region17: #{tpu_custom_call.1} parent=11 // pred_check
          %p152 = pneg %p102
        $region18: #{tpu_custom_call.1} parent=11 // pred_check_branch
          %154 = sbr.rel (%p152) target = $region20
        $region19: #{tpu_custom_call.1} parent=11 // pred_region
          %p155 = scmp.lt.s32.totalorder %s21, 0
          %s156 = scalar_select %p155, %s21, 0
          %s157 = scalar_lea.vmem %s2, %s156
        $region20: #{tpu_custom_call.1} parent=11 // pred_fallthru
          _
      $region12: #{tpu_custom_call.1} parent=5 // pred_fallthru
        _
      %p158 = scmp.lt.s32.totalorder %s12, 2
      // Predicated region
      $region21: #{tpu_custom_call.1} parent=5 // pred_check
        %p159 = pneg %p158
      $region22: #{tpu_custom_call.1} parent=5 // pred_check_branch
        %161 = sbr.rel (%p159) target = $region24
      $region23: #{tpu_custom_call.1} parent=5 // pred_region
        // Predicated region
        $region25: #{tpu_custom_call.1} parent=23 // pred_check
          %p162 = pneg %p44
        $region26: #{tpu_custom_call.1} parent=23 // pred_check_branch
          %164 = sbr.rel (%p162) target = $region28
        $region27: #{tpu_custom_call.1} parent=23 // pred_region
          %s165 = smul.u32 32, %s20
          %p166 = scmp.lt.s32.totalorder %s165, 63
          %s167 = scalar_select %p166, %s165, 63
          %s168 = smul.addr %s167, 2
          %s169 = smul.addr %s168, 4
          %s170 = scalar_lea.vmem %s0, %s169
          %s171 = smul.u32 32, %s20
        $region28: #{tpu_custom_call.1} parent=23 // pred_fallthru
          _
      $region24: #{tpu_custom_call.1} parent=5 // pred_fallthru
        _
      %p172 = scmp.le.s32.totalorder 1, %s12
      %p173 = scmp.lt.s32.totalorder %s12, 3
      %p174 = pnand %p172, %p173
      %p175 = pneg %p174
      // Predicated region
      $region29: #{tpu_custom_call.1} parent=5 // pred_check
        _
      $region30: #{tpu_custom_call.1} parent=5 // pred_check_branch
        %177 = sbr.rel (%p174) target = $region32
      $region31: #{tpu_custom_call.1} parent=5 // pred_region
        %s178 = ssub.s32 %s12, 1
        %s179 = smul.u32 32, %s22
        %p180 = scmp.lt.s32.totalorder %s179, 63
        %s181 = scalar_select %p180, %s179, 63
        %s182 = smul.addr %s181, 2
        %s183 = smul.addr %s182, 4
        %s184 = scalar_lea.vmem %s0, %s183
        %p185 = pneg %p50
        %p186 = pneg %p47
        %p187 = scmp.lt.s32.totalorder %s21, 0
        %s188 = scalar_select %p187, %s21, 0
        %s189 = smul.addr %s188, 4
        %s190 = scalar_lea.vmem %s1, %s189
        %p191 = pneg %p76
        %p192 = pneg %p73
        %p193 = scmp.lt.s32.totalorder %s21, 0
        %s194 = scalar_select %p193, %s21, 0
        %s195 = scalar_lea.vmem %s2, %s194
        %p196 = pneg %p102
        %p197 = pneg %p99
        %p198 = pneg %p130
        %p199 = pneg %p127
        %s200 = sand.u32 %s117, 1
        %s201 = scalar_lea.sflag [#allocation3], %s200
        %s202 = sand.u32 %s117, 1
        %s203 = smul.addr %s202, 128
        %s204 = scalar_lea.vmem [#allocation2], %s203
        %s205 = smul.u32 32, %s22
        %p206 = scmp.lt.s32.totalorder %s205, 63
        %s207 = scalar_select %p206, %s205, 63
        %s208 = smul.addr %s207, 2
        %s209 = smul.addr %s208, 4
        %s210 = scalar_lea.vmem %s0, %s209
        %s211 = smul.u32 32, %s22
        %p212 = scmp.lt.s32.totalorder %s21, 0
        %s213 = scalar_select %p212, %s21, 0
        %s214 = smul.addr %s213, 4
        %s215 = scalar_lea.vmem %s1, %s214
        %p216 = scmp.lt.s32.totalorder %s21, 0
        %s217 = scalar_select %p216, %s21, 0
        %s218 = scalar_lea.vmem %s2, %s217
        %s219 = smul.u32 32, %s22
        %v221 = vld [vmem:[%s210] sm:$0xff]
        %v222 = vld [vmem:[%s210 + $0x8] sm:$0xff]
        %v223 = vld [vmem:[%s210 + $0x10] sm:$0xff]
        %v224 = vld [vmem:[%s210 + $0x18] sm:$0xff]
        %v225 = vld [vmem:[%s210 + $0x20] sm:$0xff]
        %v226 = vld [vmem:[%s210 + $0x28] sm:$0xff]
        %v227 = vld [vmem:[%s210 + $0x30] sm:$0xff]
        %v228 = vld [vmem:[%s210 + $0x38] sm:$0xff]
        %v229 = vld [vmem:[%s210 + $0x40] sm:$0xff]
        %v230 = vld [vmem:[%s210 + $0x48] sm:$0xff]
        %v231 = vld [vmem:[%s210 + $0x50] sm:$0xff]
        %v232 = vld [vmem:[%s210 + $0x58] sm:$0xff]
        %v233 = vld [vmem:[%s210 + $0x60] sm:$0xff]
        %v234 = vld [vmem:[%s210 + $0x68] sm:$0xff]
        %v235 = vld [vmem:[%s210 + $0x70] sm:$0xff]
        %v236 = vld [vmem:[%s210 + $0x78] sm:$0xff]
        %v237 = vld [vmem:[%s210 + $0x80] sm:$0xff]
        %v238 = vld [vmem:[%s210 + $0x88] sm:$0xff]
        %v239 = vld [vmem:[%s210 + $0x90] sm:$0xff]
        %v240 = vld [vmem:[%s210 + $0x98] sm:$0xff]
        %v241 = vld [vmem:[%s210 + $0xa0] sm:$0xff]
        %v242 = vld [vmem:[%s210 + $0xa8] sm:$0xff]
        %v243 = vld [vmem:[%s210 + $0xb0] sm:$0xff]
        %v244 = vld [vmem:[%s210 + $0xb8] sm:$0xff]
        %v245 = vld [vmem:[%s210 + $0xc0] sm:$0xff]
        %v246 = vld [vmem:[%s210 + $0xc8] sm:$0xff]
        %v247 = vld [vmem:[%s210 + $0xd0] sm:$0xff]
        %v248 = vld [vmem:[%s210 + $0xd8] sm:$0xff]
        %v249 = vld [vmem:[%s210 + $0xe0] sm:$0xff]
        %v250 = vld [vmem:[%s210 + $0xe8] sm:$0xff]
        %v251 = vld [vmem:[%s210 + $0xf0] sm:$0xff]
        %v252 = vld [vmem:[%s210 + $0xf8] sm:$0xff]
        %v253 = vld [vmem:[%s215] sm:$0xf]
        %v254 = vld [vmem:[%s215 + $0x4] sm:$0xf]
        %v255 = vld [vmem:[%s215 + $0x8] sm:$0xf]
        %v256 = vld [vmem:[%s215 + $0xc] sm:$0xf]
        %v257 = vld [vmem:[%s215 + $0x10] sm:$0xf]
        %v258 = vld [vmem:[%s215 + $0x14] sm:$0xf]
        %v259 = vld [vmem:[%s215 + $0x18] sm:$0xf]
        %v260 = vld [vmem:[%s215 + $0x1c] sm:$0xf]
        %v261 = vld [vmem:[%s215 + $0x20] sm:$0xf]
        %v262 = vld [vmem:[%s215 + $0x24] sm:$0xf]
        %v263 = vld [vmem:[%s215 + $0x28] sm:$0xf]
        %v264 = vld [vmem:[%s215 + $0x2c] sm:$0xf]
        %v265 = vld [vmem:[%s215 + $0x30] sm:$0xf]
        %v266 = vld [vmem:[%s215 + $0x34] sm:$0xf]
        %v267 = vld [vmem:[%s215 + $0x38] sm:$0xf]
        %v268 = vld [vmem:[%s215 + $0x3c] sm:$0xf]
        %v269 = vld [vmem:[%s215 + $0x40] sm:$0xf]
        %v270 = vld [vmem:[%s215 + $0x44] sm:$0xf]
        %v271 = vld [vmem:[%s215 + $0x48] sm:$0xf]
        %v272 = vld [vmem:[%s215 + $0x4c] sm:$0xf]
        %v273 = vld [vmem:[%s215 + $0x50] sm:$0xf]
        %v274 = vld [vmem:[%s215 + $0x54] sm:$0xf]
        %v275 = vld [vmem:[%s215 + $0x58] sm:$0xf]
        %v276 = vld [vmem:[%s215 + $0x5c] sm:$0xf]
        %v277 = vld [vmem:[%s215 + $0x60] sm:$0x3]
        %v278 = vld [vmem:[%s218] sm:$0x1]
        %v280 = vlaneseq
        %v281 = vshrl.u32 %v280, 7
        %v282 = vsub.s32 0, %v281
        %v283 = vrot.slane %v278, %v282
        %v317 = vunpack.c.l.b16 %v221
        %v318 = vunpack.c.h.b16 %v221
        %v319 = vunpack.c.l.b16 %v222
        %v320 = vunpack.c.h.b16 %v222
        %v321 = vunpack.c.l.b16 %v223
        %v322 = vunpack.c.h.b16 %v223
        %v323 = vunpack.c.l.b16 %v224
        %v324 = vunpack.c.h.b16 %v224
        %v325 = vunpack.c.l.b16 %v225
        %v326 = vunpack.c.h.b16 %v225
        %v327 = vunpack.c.l.b16 %v226
        %v328 = vunpack.c.h.b16 %v226
        %v329 = vunpack.c.l.b16 %v227
        %v330 = vunpack.c.h.b16 %v227
        %v331 = vunpack.c.l.b16 %v228
        %v332 = vunpack.c.h.b16 %v228
        %v333 = vunpack.c.l.b16 %v229
        %v334 = vunpack.c.h.b16 %v229
        %v335 = vunpack.c.l.b16 %v230
        %v336 = vunpack.c.h.b16 %v230
        %v337 = vunpack.c.l.b16 %v231
        %v338 = vunpack.c.h.b16 %v231
        %v339 = vunpack.c.l.b16 %v232
        %v340 = vunpack.c.h.b16 %v232
        %v341 = vunpack.c.l.b16 %v233
        %v342 = vunpack.c.h.b16 %v233
        %v343 = vunpack.c.l.b16 %v234
        %v344 = vunpack.c.h.b16 %v234
        %v345 = vunpack.c.l.b16 %v235
        %v346 = vunpack.c.h.b16 %v235
        %v347 = vunpack.c.l.b16 %v236
        %v348 = vunpack.c.h.b16 %v236
        %v349 = vunpack.c.l.b16 %v237
        %v350 = vunpack.c.h.b16 %v237
        %v351 = vunpack.c.l.b16 %v238
        %v352 = vunpack.c.h.b16 %v238
        %v353 = vunpack.c.l.b16 %v239
        %v354 = vunpack.c.h.b16 %v239
        %v355 = vunpack.c.l.b16 %v240
        %v356 = vunpack.c.h.b16 %v240
        %v357 = vunpack.c.l.b16 %v241
        %v358 = vunpack.c.h.b16 %v241
        %v359 = vunpack.c.l.b16 %v242
        %v360 = vunpack.c.h.b16 %v242
        %v361 = vunpack.c.l.b16 %v243
        %v362 = vunpack.c.h.b16 %v243
        %v363 = vunpack.c.l.b16 %v244
        %v364 = vunpack.c.h.b16 %v244
        %v365 = vunpack.c.l.b16 %v245
        %v366 = vunpack.c.h.b16 %v245
        %v367 = vunpack.c.l.b16 %v246
        %v368 = vunpack.c.h.b16 %v246
        %v369 = vunpack.c.l.b16 %v247
        %v370 = vunpack.c.h.b16 %v247
        %v371 = vunpack.c.l.b16 %v248
        %v372 = vunpack.c.h.b16 %v248
        %v373 = vunpack.c.l.b16 %v249
        %v374 = vunpack.c.h.b16 %v249
        %v375 = vunpack.c.l.b16 %v250
        %v376 = vunpack.c.h.b16 %v250
        %v377 = vunpack.c.l.b16 %v251
        %v378 = vunpack.c.h.b16 %v251
        %v379 = vunpack.c.l.b16 %v252
        %v380 = vunpack.c.h.b16 %v252
        %v381 = vpack.c.b16 %v319, %v317
        %v382 = vpack.c.b16 %v320, %v318
        %v383 = vpack.c.b16 %v323, %v321
        %v384 = vpack.c.b16 %v324, %v322
        %v385 = vpack.c.b16 %v327, %v325
        %v386 = vpack.c.b16 %v328, %v326
        %v387 = vpack.c.b16 %v331, %v329
        %v388 = vpack.c.b16 %v332, %v330
        %v389 = vpack.c.b16 %v335, %v333
        %v390 = vpack.c.b16 %v336, %v334
        %v391 = vpack.c.b16 %v339, %v337
        %v392 = vpack.c.b16 %v340, %v338
        %v393 = vpack.c.b16 %v343, %v341
        %v394 = vpack.c.b16 %v344, %v342
        %v395 = vpack.c.b16 %v347, %v345
        %v396 = vpack.c.b16 %v348, %v346
        %v397 = vpack.c.b16 %v351, %v349
        %v398 = vpack.c.b16 %v352, %v350
        %v399 = vpack.c.b16 %v355, %v353
        %v400 = vpack.c.b16 %v356, %v354
        %v401 = vpack.c.b16 %v359, %v357
        %v402 = vpack.c.b16 %v360, %v358
        %v403 = vpack.c.b16 %v363, %v361
        %v404 = vpack.c.b16 %v364, %v362
        %v405 = vpack.c.b16 %v367, %v365
        %v406 = vpack.c.b16 %v368, %v366
        %v407 = vpack.c.b16 %v371, %v369
        %v408 = vpack.c.b16 %v372, %v370
        %v409 = vpack.c.b16 %v375, %v373
        %v410 = vpack.c.b16 %v376, %v374
        %v411 = vpack.c.b16 %v379, %v377
        %v412 = vpack.c.b16 %v380, %v378
        %v454 = vunpack.c.l.b16 %v253
        %v455 = vunpack.c.l.b16 %v254
        %v456 = vunpack.c.l.b16 %v255
        %v457 = vunpack.c.l.b16 %v256
        %v458 = vunpack.c.l.b16 %v257
        %v459 = vunpack.c.l.b16 %v258
        %v460 = vunpack.c.l.b16 %v259
        %v461 = vunpack.c.l.b16 %v260
        %v462 = vunpack.c.l.b16 %v261
        %v463 = vunpack.c.l.b16 %v262
        %v464 = vunpack.c.l.b16 %v263
        %v465 = vunpack.c.l.b16 %v264
        %v466 = vunpack.c.l.b16 %v265
        %v467 = vunpack.c.l.b16 %v266
        %v468 = vunpack.c.l.b16 %v267
        %v469 = vunpack.c.l.b16 %v268
        %v470 = vunpack.c.l.b16 %v269
        %v471 = vunpack.c.l.b16 %v270
        %v472 = vunpack.c.l.b16 %v271
        %v473 = vunpack.c.l.b16 %v272
        %v474 = vunpack.c.l.b16 %v273
        %v475 = vunpack.c.l.b16 %v274
        %v476 = vunpack.c.l.b16 %v275
        %v477 = vunpack.c.l.b16 %v276
        %v478 = vunpack.c.l.b16 %v277
        %v479 = vpack.c.b16 %v455, %v454
        %v480 = vpack.c.b16 %v457, %v456
        %v481 = vpack.c.b16 %v459, %v458
        %v482 = vpack.c.b16 %v461, %v460
        %v483 = vpack.c.b16 %v463, %v462
        %v484 = vpack.c.b16 %v465, %v464
        %v485 = vpack.c.b16 %v467, %v466
        %v486 = vpack.c.b16 %v469, %v468
        %v487 = vpack.c.b16 %v471, %v470
        %v488 = vpack.c.b16 %v473, %v472
        %v489 = vpack.c.b16 %v475, %v474
        %v490 = vpack.c.b16 %v477, %v476
        %v491 = vpack.c.b16 %v478, %v478
        %vm504 = vcmask 556032
        %v506 = vsel %vm504, %v382, 0
        %v509 = vsel %vm504, %v384, 0
        %v512 = vsel %vm504, %v386, 0
        %v515 = vsel %vm504, %v388, 0
        %v518 = vsel %vm504, %v390, 0
        %v521 = vsel %vm504, %v392, 0
        %v524 = vsel %vm504, %v394, 0
        %v527 = vsel %vm504, %v396, 0
        %v530 = vsel %vm504, %v398, 0
        %v533 = vsel %vm504, %v400, 0
        %v536 = vsel %vm504, %v402, 0
        %v539 = vsel %vm504, %v404, 0
        %v542 = vsel %vm504, %v406, 0
        %v545 = vsel %vm504, %v408, 0
        %v548 = vsel %vm504, %v410, 0
        %v551 = vsel %vm504, %v412, 0
        %vm553 = vcmask 1041408
        %v555 = vsel %vm553, %v491, 0
        %557 = vmatprep.subr.bf16.mxu0 0
        %558 = vmatpush1.bf16.msra.mxu0 %v479
        %559 = vmatprep.subr.bf16.mxu0 0
        %560 = vmatpush1.bf16.msra.mxu0 %v480
        %561 = vmatprep.subr.bf16.mxu0 0
        %562 = vmatpush1.bf16.msra.mxu0 %v481
        %563 = vmatprep.subr.bf16.mxu0 0
        %564 = vmatpush1.bf16.msra.mxu0 %v482
        %565 = vmatprep.subr.bf16.mxu0 0
        %566 = vmatpush1.bf16.msra.mxu0 %v483
        %567 = vmatprep.subr.bf16.mxu0 0
        %568 = vmatpush1.bf16.msra.mxu0 %v484
        %569 = vmatprep.subr.bf16.mxu0 0
        %570 = vmatpush1.bf16.msra.mxu0 %v485
        %571 = vmatprep.subr.bf16.mxu0 0
        %572 = vmatpush1.bf16.msra.mxu0 %v486
        %573 = vmatprep.subr.bf16.mxu0 0
        %574 = vmatpush1.bf16.msra.mxu0 %v487
        %575 = vmatprep.subr.bf16.mxu0 0
        %576 = vmatpush1.bf16.msra.mxu0 %v488
        %577 = vmatprep.subr.bf16.mxu0 0
        %578 = vmatpush1.bf16.msra.mxu0 %v489
        %579 = vmatprep.subr.bf16.mxu0 0
        %580 = vmatpush1.bf16.msra.mxu0 %v490
        %581 = vmatprep.subr.bf16.mxu0 0
        %582 = vmatpush1.bf16.msra.mxu0 %v555
        %583 = vmatprep.subr.bf16.mxu0 0
        %584 = vmatpush1.bf16.msra.mxu0 0
        %585 = vmatprep.subr.bf16.mxu0 0
        %586 = vmatpush1.bf16.msra.mxu0 0
        %587 = vmatprep.subr.bf16.mxu0 0
        %588 = vmatpush1.bf16.msra.mxu0 0
        %589 = vmatprep.mubr.bf16.mxu0 %v506
        %590 = vmatmul.mubr.bf16.gmra.mrb[0].mxu0 %v381
        %v591 = vpop.f32.mrb[0].mxu0
        %v592 = vadd.f32 %v283, %v591
        %v593 = vpop.f32.mrb[0].mxu0
        %v594 = vpop.f32.mrb[0].mxu0
        %v595 = vadd.f32 %v283, %v594
        %v596 = vpop.f32.mrb[0].mxu0
        %597 = vmatprep.mubr.bf16.mxu0 %v509
        %598 = vmatmul.mubr.bf16.gmra.mrb[0].mxu0 %v383
        %v599 = vpop.f32.mrb[0].mxu0
        %v600 = vadd.f32 %v283, %v599
        %v601 = vpop.f32.mrb[0].mxu0
        %v602 = vpop.f32.mrb[0].mxu0
        %v603 = vadd.f32 %v283, %v602
        %v604 = vpop.f32.mrb[0].mxu0
        %605 = vmatprep.mubr.bf16.mxu0 %v512
        %606 = vmatmul.mubr.bf16.gmra.mrb[0].mxu0 %v385
        %v607 = vpop.f32.mrb[0].mxu0
        %v608 = vadd.f32 %v283, %v607
        %v609 = vpop.f32.mrb[0].mxu0
        %v610 = vpop.f32.mrb[0].mxu0
        %v611 = vadd.f32 %v283, %v610
        %v612 = vpop.f32.mrb[0].mxu0
        %613 = vmatprep.mubr.bf16.mxu0 %v515
        %614 = vmatmul.mubr.bf16.gmra.mrb[0].mxu0 %v387
        %v615 = vpop.f32.mrb[0].mxu0
        %v616 = vadd.f32 %v283, %v615
        %v617 = vpop.f32.mrb[0].mxu0
        %v618 = vpop.f32.mrb[0].mxu0
        %v619 = vadd.f32 %v283, %v618
        %v620 = vpop.f32.mrb[0].mxu0
        %621 = vmatprep.mubr.bf16.mxu0 %v518
        %622 = vmatmul.mubr.bf16.gmra.mrb[0].mxu0 %v389
        %v623 = vpop.f32.mrb[0].mxu0
        %v624 = vadd.f32 %v283, %v623
        %v625 = vpop.f32.mrb[0].mxu0
        %v626 = vpop.f32.mrb[0].mxu0
        %v627 = vadd.f32 %v283, %v626
        %v628 = vpop.f32.mrb[0].mxu0
        %629 = vmatprep.mubr.bf16.mxu0 %v521
        %630 = vmatmul.mubr.bf16.gmra.mrb[0].mxu0 %v391
        %v631 = vpop.f32.mrb[0].mxu0
        %v632 = vadd.f32 %v283, %v631
        %v633 = vpop.f32.mrb[0].mxu0
        %v634 = vpop.f32.mrb[0].mxu0
        %v635 = vadd.f32 %v283, %v634
        %v636 = vpop.f32.mrb[0].mxu0
        %637 = vmatprep.mubr.bf16.mxu0 %v524
        %638 = vmatmul.mubr.bf16.gmra.mrb[0].mxu0 %v393
        %v639 = vpop.f32.mrb[0].mxu0
        %v640 = vadd.f32 %v283, %v639
        %v641 = vpop.f32.mrb[0].mxu0
        %v642 = vpop.f32.mrb[0].mxu0
        %v643 = vadd.f32 %v283, %v642
        %v644 = vpop.f32.mrb[0].mxu0
        %645 = vmatprep.mubr.bf16.mxu0 %v527
        %646 = vmatmul.mubr.bf16.gmra.mrb[0].mxu0 %v395
        %v647 = vpop.f32.mrb[0].mxu0
        %v648 = vadd.f32 %v283, %v647
        %v649 = vpop.f32.mrb[0].mxu0
        %v650 = vpop.f32.mrb[0].mxu0
        %v651 = vadd.f32 %v283, %v650
        %v652 = vpop.f32.mrb[0].mxu0
        %653 = vmatprep.mubr.bf16.mxu0 %v530
        %654 = vmatmul.mubr.bf16.gmra.mrb[0].mxu0 %v397
        %v655 = vpop.f32.mrb[0].mxu0
        %v656 = vadd.f32 %v283, %v655
        %v657 = vpop.f32.mrb[0].mxu0
        %v658 = vpop.f32.mrb[0].mxu0
        %v659 = vadd.f32 %v283, %v658
        %v660 = vpop.f32.mrb[0].mxu0
        %661 = vmatprep.mubr.bf16.mxu0 %v533
        %662 = vmatmul.mubr.bf16.gmra.mrb[0].mxu0 %v399
        %v663 = vpop.f32.mrb[0].mxu0
        %v664 = vadd.f32 %v283, %v663
        %v665 = vpop.f32.mrb[0].mxu0
        %v666 = vpop.f32.mrb[0].mxu0
        %v667 = vadd.f32 %v283, %v666
        %v668 = vpop.f32.mrb[0].mxu0
        %669 = vmatprep.mubr.bf16.mxu0 %v536
        %670 = vmatmul.mubr.bf16.gmra.mrb[0].mxu0 %v401
        %v671 = vpop.f32.mrb[0].mxu0
        %v672 = vadd.f32 %v283, %v671
        %v673 = vpop.f32.mrb[0].mxu0
        %v674 = vpop.f32.mrb[0].mxu0
        %v675 = vadd.f32 %v283, %v674
        %v676 = vpop.f32.mrb[0].mxu0
        %677 = vmatprep.mubr.bf16.mxu0 %v539
        %678 = vmatmul.mubr.bf16.gmra.mrb[0].mxu0 %v403
        %v679 = vpop.f32.mrb[0].mxu0
        %v680 = vadd.f32 %v283, %v679
        %v681 = vpop.f32.mrb[0].mxu0
        %v682 = vpop.f32.mrb[0].mxu0
        %v683 = vadd.f32 %v283, %v682
        %v684 = vpop.f32.mrb[0].mxu0
        %685 = vmatprep.mubr.bf16.mxu0 %v542
        %686 = vmatmul.mubr.bf16.gmra.mrb[0].mxu0 %v405
        %v687 = vpop.f32.mrb[0].mxu0
        %v688 = vadd.f32 %v283, %v687
        %v689 = vpop.f32.mrb[0].mxu0
        %v690 = vpop.f32.mrb[0].mxu0
        %v691 = vadd.f32 %v283, %v690
        %v692 = vpop.f32.mrb[0].mxu0
        %693 = vmatprep.mubr.bf16.mxu0 %v545
        %694 = vmatmul.mubr.bf16.gmra.mrb[0].mxu0 %v407
        %v695 = vpop.f32.mrb[0].mxu0
        %v696 = vadd.f32 %v283, %v695
        %v697 = vpop.f32.mrb[0].mxu0
        %v698 = vpop.f32.mrb[0].mxu0
        %v699 = vadd.f32 %v283, %v698
        %v700 = vpop.f32.mrb[0].mxu0
        %701 = vmatprep.mubr.bf16.mxu0 %v548
        %702 = vmatmul.mubr.bf16.gmra.mrb[0].mxu0 %v409
        %v703 = vpop.f32.mrb[0].mxu0
        %v704 = vadd.f32 %v283, %v703
        %v705 = vpop.f32.mrb[0].mxu0
        %v706 = vpop.f32.mrb[0].mxu0
        %v707 = vadd.f32 %v283, %v706
        %v708 = vpop.f32.mrb[0].mxu0
        %709 = vmatprep.mubr.bf16.mxu0 %v551
        %710 = vmatmul.mubr.bf16.gmra.mrb[0].mxu0 %v411
        %v711 = vpop.f32.mrb[0].mxu0
        %v712 = vadd.f32 %v283, %v711
        %v713 = vpop.f32.mrb[0].mxu0
        %v714 = vpop.f32.mrb[0].mxu0
        %v715 = vadd.f32 %v283, %v714
        %v716 = vpop.f32.mrb[0].mxu0
        %717 = vdwg.mxu0
        %v718 = vpack.c.bf16 %v595, %v592
        %v719 = vpack.c.bf16 %v603, %v600
        %v720 = vpack.c.bf16 %v611, %v608
        %v721 = vpack.c.bf16 %v619, %v616
        %v722 = vpack.c.bf16 %v627, %v624
        %v723 = vpack.c.bf16 %v635, %v632
        %v724 = vpack.c.bf16 %v643, %v640
        %v725 = vpack.c.bf16 %v651, %v648
        %v726 = vpack.c.bf16 %v659, %v656
        %v727 = vpack.c.bf16 %v667, %v664
        %v728 = vpack.c.bf16 %v675, %v672
        %v729 = vpack.c.bf16 %v683, %v680
        %v730 = vpack.c.bf16 %v691, %v688
        %v731 = vpack.c.bf16 %v699, %v696
        %v732 = vpack.c.bf16 %v707, %v704
        %v733 = vpack.c.bf16 %v715, %v712
        %v750 = vunpack.c.l.b16 %v718
        %v751 = vunpack.c.h.b16 %v718
        %v752 = vunpack.c.l.b16 %v719
        %v753 = vunpack.c.h.b16 %v719
        %v754 = vunpack.c.l.b16 %v720
        %v755 = vunpack.c.h.b16 %v720
        %v756 = vunpack.c.l.b16 %v721
        %v757 = vunpack.c.h.b16 %v721
        %v758 = vunpack.c.l.b16 %v722
        %v759 = vunpack.c.h.b16 %v722
        %v760 = vunpack.c.l.b16 %v723
        %v761 = vunpack.c.h.b16 %v723
        %v762 = vunpack.c.l.b16 %v724
        %v763 = vunpack.c.h.b16 %v724
        %v764 = vunpack.c.l.b16 %v725
        %v765 = vunpack.c.h.b16 %v725
        %v766 = vunpack.c.l.b16 %v726
        %v767 = vunpack.c.h.b16 %v726
        %v768 = vunpack.c.l.b16 %v727
        %v769 = vunpack.c.h.b16 %v727
        %v770 = vunpack.c.l.b16 %v728
        %v771 = vunpack.c.h.b16 %v728
        %v772 = vunpack.c.l.b16 %v729
        %v773 = vunpack.c.h.b16 %v729
        %v774 = vunpack.c.l.b16 %v730
        %v775 = vunpack.c.h.b16 %v730
        %v776 = vunpack.c.l.b16 %v731
        %v777 = vunpack.c.h.b16 %v731
        %v778 = vunpack.c.l.b16 %v732
        %v779 = vunpack.c.h.b16 %v732
        %v780 = vunpack.c.l.b16 %v733
        %v781 = vunpack.c.h.b16 %v733
        %v782 = vpack.c.b16 %v750, %v750
        %v783 = vpack.c.b16 %v751, %v751
        %v784 = vpack.c.b16 %v752, %v752
        %v785 = vpack.c.b16 %v753, %v753
        %v786 = vpack.c.b16 %v754, %v754
        %v787 = vpack.c.b16 %v755, %v755
        %v788 = vpack.c.b16 %v756, %v756
        %v789 = vpack.c.b16 %v757, %v757
        %v790 = vpack.c.b16 %v758, %v758
        %v791 = vpack.c.b16 %v759, %v759
        %v792 = vpack.c.b16 %v760, %v760
        %v793 = vpack.c.b16 %v761, %v761
        %v794 = vpack.c.b16 %v762, %v762
        %v795 = vpack.c.b16 %v763, %v763
        %v796 = vpack.c.b16 %v764, %v764
        %v797 = vpack.c.b16 %v765, %v765
        %v798 = vpack.c.b16 %v766, %v766
        %v799 = vpack.c.b16 %v767, %v767
        %v800 = vpack.c.b16 %v768, %v768
        %v801 = vpack.c.b16 %v769, %v769
        %v802 = vpack.c.b16 %v770, %v770
        %v803 = vpack.c.b16 %v771, %v771
        %v804 = vpack.c.b16 %v772, %v772
        %v805 = vpack.c.b16 %v773, %v773
        %v806 = vpack.c.b16 %v774, %v774
        %v807 = vpack.c.b16 %v775, %v775
        %v808 = vpack.c.b16 %v776, %v776
        %v809 = vpack.c.b16 %v777, %v777
        %v810 = vpack.c.b16 %v778, %v778
        %v811 = vpack.c.b16 %v779, %v779
        %v812 = vpack.c.b16 %v780, %v780
        %v813 = vpack.c.b16 %v781, %v781
        %846 = vst [vmem:[%s204] sm:$0xf] %v782
        %847 = vst [vmem:[%s204 + $0x4] sm:$0xf] %v783
        %848 = vst [vmem:[%s204 + $0x8] sm:$0xf] %v784
        %849 = vst [vmem:[%s204 + $0xc] sm:$0xf] %v785
        %850 = vst [vmem:[%s204 + $0x10] sm:$0xf] %v786
        %851 = vst [vmem:[%s204 + $0x14] sm:$0xf] %v787
        %852 = vst [vmem:[%s204 + $0x18] sm:$0xf] %v788
        %853 = vst [vmem:[%s204 + $0x1c] sm:$0xf] %v789
        %854 = vst [vmem:[%s204 + $0x20] sm:$0xf] %v790
        %855 = vst [vmem:[%s204 + $0x24] sm:$0xf] %v791
        %856 = vst [vmem:[%s204 + $0x28] sm:$0xf] %v792
        %857 = vst [vmem:[%s204 + $0x2c] sm:$0xf] %v793
        %858 = vst [vmem:[%s204 + $0x30] sm:$0xf] %v794
        %859 = vst [vmem:[%s204 + $0x34] sm:$0xf] %v795
        %860 = vst [vmem:[%s204 + $0x38] sm:$0xf] %v796
        %861 = vst [vmem:[%s204 + $0x3c] sm:$0xf] %v797
        %862 = vst [vmem:[%s204 + $0x40] sm:$0xf] %v798
        %863 = vst [vmem:[%s204 + $0x44] sm:$0xf] %v799
        %864 = vst [vmem:[%s204 + $0x48] sm:$0xf] %v800
        %865 = vst [vmem:[%s204 + $0x4c] sm:$0xf] %v801
        %866 = vst [vmem:[%s204 + $0x50] sm:$0xf] %v802
        %867 = vst [vmem:[%s204 + $0x54] sm:$0xf] %v803
        %868 = vst [vmem:[%s204 + $0x58] sm:$0xf] %v804
        %869 = vst [vmem:[%s204 + $0x5c] sm:$0xf] %v805
        %870 = vst [vmem:[%s204 + $0x60] sm:$0xf] %v806
        %871 = vst [vmem:[%s204 + $0x64] sm:$0xf] %v807
        %872 = vst [vmem:[%s204 + $0x68] sm:$0xf] %v808
        %873 = vst [vmem:[%s204 + $0x6c] sm:$0xf] %v809
        %874 = vst [vmem:[%s204 + $0x70] sm:$0xf] %v810
        %875 = vst [vmem:[%s204 + $0x74] sm:$0xf] %v811
        %876 = vst [vmem:[%s204 + $0x78] sm:$0xf] %v812
        %877 = vst [vmem:[%s204 + $0x7c] sm:$0xf] %v813
        %s878 = sand.u32 %s117, 1
        %s879 = scalar_lea.sflag [#allocation3], %s878
        %s880 = sand.u32 %s117, 1
        %s881 = smul.addr %s880, 128
        %s882 = scalar_lea.vmem [#allocation2], %s881
        // Predicated region
        $region33: #{tpu_custom_call.1} parent=31 // pred_check
          %p883 = pneg %p127
        $region34: #{tpu_custom_call.1} parent=31 // pred_check_branch
          %885 = sbr.rel (%p883) target = $region36
        $region35: #{tpu_custom_call.1} parent=31 // pred_region
          %s886 = smul.u32 32, %s22
          %s888 = ssub.s32 2048, 2048
          %889 = vsyncadd %s879, %s888
          %s890 = sadd.s32 %s21, %s886
          %s891 = smul.addr %s890, 64
          %s892 = scalar_lea.hbm %s3, %s891
          %s893 = sshll.u32 %s882, 4
          %s894 = int_to_ptr.vmem [resolvable:$true] %s893
          %899 = dma.vmem_to_hbm [thread:$0]  %s894, 2048, %s892, %s879, 64, 64, 4
        $region36: #{tpu_custom_call.1} parent=31 // pred_fallthru
          _
      $region32: #{tpu_custom_call.1} parent=5 // pred_fallthru
        _
      %p900 = scmp.le.s32.totalorder 2, %s12
      // Predicated region
      $region37: #{tpu_custom_call.1} parent=5 // pred_check
        %p901 = pneg %p900
      $region38: #{tpu_custom_call.1} parent=5 // pred_check_branch
        %903 = sbr.rel (%p901) target = $region40
      $region39: #{tpu_custom_call.1} parent=5 // pred_region
        %s904 = ssub.s32 %s12, 2
        // Predicated region
        $region41: #{tpu_custom_call.1} parent=39 // pred_check
          %p905 = pneg %p133
        $region42: #{tpu_custom_call.1} parent=39 // pred_check_branch
          %907 = sbr.rel (%p905) target = $region44
        $region43: #{tpu_custom_call.1} parent=39 // pred_region
          %s908 = sand.u32 %s118, 1
          %s909 = scalar_lea.sflag [#allocation3], %s908
          %s910 = sand.u32 %s118, 1
          %s911 = smul.addr %s910, 128
          %s912 = scalar_lea.vmem [#allocation2], %s911
          %913 = dma.done %s909, 2048
        $region44: #{tpu_custom_call.1} parent=39 // pred_fallthru
          _
      $region40: #{tpu_custom_call.1} parent=5 // pred_fallthru
        _
    $region6: #{tpu_custom_call.1} parent=1 // loop_footer
      %s16 = sadd.s32 1, %s12
    $region7: #{tpu_custom_call.1} parent=1 // loop_footer_branch
      %11 = sbr.rel target = $region3
    $region8: #{tpu_custom_call.1} parent=1 // loop_exit
      _
    %914 = vsyncpa [#allocation3], 1
    %s915 = scalar_lea.sflag [#allocation3], 1
    %916 = vsyncpa %s915, 1

</llo_original>
